<compile_context>
chip_gen: v5e
topology: v5e:2x2
jax: 0.10.0
libtpu: 0.0.40
codegen_flags: <defaults>
</compile_context>

<pallas_src>
import functools
import math

import jax
import jax.numpy as jnp
import numpy as np
from jax.experimental import pallas as pl
from jax.experimental.pallas import tpu as pltpu


def _round_up(a, m):
    return (a + m - 1) // m * m


# ----------------------------------------------------------------------------
# Kernel
# ----------------------------------------------------------------------------
def _mtff_kernel(x_ref, w_ref, b_ref, o_ref, acc_ref, *, num_t, o_pad):
    """One (batch-tile, K-tile) grid step.

    x_ref  : (tb, tk)        input activations, native dtype (cast to bf16 here)
    w_ref  : (tk, 2*T*O_pad) bf16 fused weights  [resp_0..resp_{T-1} | mod_0..mod_{T-1}]
    b_ref  : (1, 2*T*O_pad)  f32 fused biases, same (lane-padded) layout
    o_ref  : (tb, O_pad)     lane-dense output tile
    acc_ref: (tb, 2*T*O_pad) f32 VMEM accumulator (persists across K steps)
    """
    k = pl.program_id(1)

    @pl.when(k == 0)
    def _init():
        # Fold the bias add into the accumulator init: exactly one broadcast,
        # no separate full-width (tb x 2*T*O_pad) VALU pass after the dot.
        acc_ref[...] = jnp.broadcast_to(b_ref[...], acc_ref.shape)

    # In-kernel bf16 cast (activations arrive in their native dtype).
    x = x_ref[...].astype(jnp.bfloat16)
    # One wide, lane-dense MXU matmul with f32 accumulation.
    acc_ref[...] += jnp.dot(x, w_ref[...], preferred_element_type=jnp.float32)

    @pl.when(k == pl.num_programs(1) - 1)
    def _epilogue():
        t_op = num_t * o_pad

        # Static, 128-lane-aligned ref slices (zero-cost views, short live ranges).
        def resp(t):
            return acc_ref[:, t * o_pad:(t + 1) * o_pad]

        def logit(t):
            return acc_ref[:, t_op + t * o_pad: t_op + (t + 1) * o_pad]

        # Softmax over the T neurotransmitters, per (batch, out) element, in f32.
        m = logit(0)
        for t in range(1, num_t):
            m = jnp.maximum(m, logit(t))

        # exp fused into the denom / numer accumulation (no materialized exps list).
        e = jnp.exp(logit(0) - m)
        denom = e
        numer = e * resp(0)
        for t in range(1, num_t):
            e = jnp.exp(logit(t) - m)
            denom = denom + e
            numer = numer + e * resp(t)

        # EUP reciprocal (separate bundle slot). Padded lanes hold all-zero
        # responses/logits -> finite zeros; the wrapper slices them away.
        inv_denom = pl.reciprocal(denom, approx=True)
        o_ref[...] = (numer * inv_denom).astype(o_ref.dtype)


# ----------------------------------------------------------------------------
# Init-time parameter packing (outside the per-call hot path)
# ----------------------------------------------------------------------------
def pack_mtff_params(weight, bias, mod_weight, mod_bias, mxu_dtype=jnp.bfloat16):
    """Pack module parameters into one fused, 128-lane-aligned weight / bias.

    weight     : (T, O, I)   neurotransmitter response weights
    bias       : (T, O)
    mod_weight : (O, T, I)   neuromodulator weights
    mod_bias   : (O, T)

    Each per-transmitter block is zero-padded from O to O_pad = round_up(O, 128)
    lanes. Column layout (width 2*T*O_pad):
        col t*O_pad + o          -> response_t[o]   (o < O, zeros otherwise)
        col T*O_pad + t*O_pad + o -> modulator_t[o] (o < O, zeros otherwise)

    Returns (w_cat (I, 2*T*O_pad) mxu_dtype, b_cat (1, 2*T*O_pad) f32, O_pad).
    """
    T, O, I = weight.shape
    O_pad = _round_up(O, 128)
    lane_pad = O_pad - O

    # responses: [i, t*O_pad + o] = weight[t, o, i]
    w_resp = jnp.transpose(weight, (2, 0, 1))                     # (I, T, O)
    w_resp = jnp.pad(w_resp, ((0, 0), (0, 0), (0, lane_pad)))     # (I, T, O_pad)
    w_resp = w_resp.reshape(I, T * O_pad)
    # modulators: [i, t*O_pad + o] = mod_weight[o, t, i]
    w_mod = jnp.transpose(mod_weight, (2, 1, 0))                  # (I, T, O)
    w_mod = jnp.pad(w_mod, ((0, 0), (0, 0), (0, lane_pad)))
    w_mod = w_mod.reshape(I, T * O_pad)
    w_cat = jnp.concatenate([w_resp, w_mod], axis=1).astype(mxu_dtype)

    b_resp = jnp.pad(bias, ((0, 0), (0, lane_pad))).reshape(T * O_pad)
    b_mod = jnp.pad(jnp.transpose(mod_bias), ((0, 0), (0, lane_pad))).reshape(T * O_pad)
    b_cat = jnp.concatenate([b_resp, b_mod])[None, :].astype(jnp.float32)
    return w_cat, b_cat, O_pad


# ----------------------------------------------------------------------------
# Wrapper
# ----------------------------------------------------------------------------
def _choose_batch_tile(B, block_b):
    if B <= 16:
        # Tiny batches: one exact (or minimally padded) f32-sublane tile.
        return _round_up(B, 8)
    # bf16 packs 16 sublanes per vreg -> keep tb a multiple of 16; cap so the
    # "parallel" batch axis has >= 2 grid steps (v7x has 2 TensorCores).
    return min(block_b, max(16, _round_up(pl.cdiv(B, 2), 16)))


def multi_transmitter_ff(x, w_cat, b_cat, *, num_t, out_features, o_pad,
                         block_b=256, block_k=512):
    """Forward pass using pre-packed parameters.

    x     : (B, I) input in its native dtype (cast to bf16 inside the kernel)
    w_cat : (I, 2*T*O_pad) bf16 fused weights (from pack_mtff_params)
    b_cat : (1, 2*T*O_pad) f32 fused biases
    """
    assert num_t >= 2, "num_neurotransmitters == 1 degenerates to nn.Linear"
    B, I = x.shape
    W = w_cat.shape[1]
    assert W == 2 * num_t * o_pad
    out_dtype = x.dtype

    # Batch tile (parallel axis).
    tb = _choose_batch_tile(B, block_b)
    # K tile over in_features (arbitrary / reduction axis, placed last).
    if I <= block_k or I % block_k != 0:
        tk = I   # TODO(synk): mask/pad ragged K for production in_features
    else:
        tk = block_k

    nb = pl.cdiv(B, tb)
    nk = pl.cdiv(I, tk)

    kernel = functools.partial(_mtff_kernel, num_t=num_t, o_pad=o_pad)

    # VMEM budget estimate (double-buffered inputs/outputs + f32 accumulator),
    # with headroom; keeps us honest on v7x's smaller 64 MiB VMEM.
    x_isz = np.dtype(x.dtype).itemsize
    est = (2 * tb * tk * x_isz            # x blocks
           + 2 * tk * W * 2               # bf16 weights
           + 2 * W * 4                    # biases
           + 2 * tb * o_pad * 4           # output blocks
           + tb * W * 4)                  # accumulator scratch
    vmem_limit = int(min(48 * 2**20, max(16 * 2**20, 4 * est)))

    cost = pl.CostEstimate(
        flops=2 * B * I * W,
        transcendentals=B * num_t * o_pad,
        bytes_accessed=B * I * x_isz + I * W * 2 + W * 4
                       + B * o_pad * np.dtype(out_dtype).itemsize,
    )

    out = pl.pallas_call(
        kernel,
        out_shape=jax.ShapeDtypeStruct((B, o_pad), out_dtype),
        grid=(nb, nk),
        in_specs=[
            pl.BlockSpec((tb, tk), lambda i, k: (i, k)),   # batch+K tiled activations
            pl.BlockSpec((tk, W), lambda i, k: (k, 0)),    # K-tiled fused weights
            pl.BlockSpec((1, W), lambda i, k: (0, 0)),     # grid-invariant fused biases
        ],
        out_specs=pl.BlockSpec((tb, o_pad), lambda i, k: (i, 0)),  # lane-dense output
        scratch_shapes=[pltpu.VMEM((tb, W), jnp.float32)],         # f32 accumulator
        compiler_params=pltpu.CompilerParams(
            dimension_semantics=("parallel", "arbitrary"),
            vmem_limit_bytes=vmem_limit,
        ),
        cost_estimate=cost,
    )(x, w_cat, b_cat)

    # Slice away the lane padding (callers that tolerate padded outputs can skip this).
    return out[:, :out_features]


# ----------------------------------------------------------------------------
# Pure-JAX reference matching the PyTorch forward exactly.
# ----------------------------------------------------------------------------
def _reference(x, weight, bias, mod_weight, mod_bias):
    modulators = jnp.einsum('ij,lkj->ilk', x, mod_weight) + mod_bias   # (B, O, T)
    modulators = jax.nn.softmax(modulators, axis=-1)
    r = jnp.einsum('ij,lkj->ilk', x, weight) + bias                    # (B, T, O)
    return jnp.einsum('ijk,ikj->ij', modulators, r)                    # (B, O)


if __name__ == "__main__":
    # Small shapes consistent with the module: (batch, in_features) input.
    B, I, O, T = 8, 32, 32, 4

    key = jax.random.PRNGKey(0)
    kx, kw, kb, kmw, kmb = jax.random.split(key, 5)

    # Deterministic kaiming-uniform-style init (a=sqrt(5) => bound = 1/sqrt(fan_in)).
    bound = 1.0 / math.sqrt(I)
    x = jax.random.normal(kx, (B, I), dtype=jnp.float32)
    weight = jax.random.uniform(kw, (T, O, I), jnp.float32, -bound, bound)
    bias = jax.random.uniform(kb, (T, O), jnp.float32, -bound, bound)
    mod_weight = jax.random.uniform(kmw, (O, T, I), jnp.float32, -bound, bound)
    mod_bias = jax.random.uniform(kmb, (O, T), jnp.float32, -bound, bound)

    # Pack once (init-time), then run the kernel.
    w_cat, b_cat, o_pad = pack_mtff_params(weight, bias, mod_weight, mod_bias)
    out = multi_transmitter_ff(x, w_cat, b_cat, num_t=T, out_features=O, o_pad=o_pad)
    out = jax.block_until_ready(out)

    # Reference uses the same bf16-quantized operands (math in f32) so the
    # comparison isolates kernel correctness; tolerance covers the approximate
    # EUP reciprocal and accumulation-order differences.
    x_q = x.astype(jnp.bfloat16).astype(jnp.float32)
    w_q = weight.astype(jnp.bfloat16).astype(jnp.float32)
    mw_q = mod_weight.astype(jnp.bfloat16).astype(jnp.float32)
    ref = _reference(x_q, w_q, bias, mw_q, mod_bias)
    np.testing.assert_allclose(np.asarray(out), np.asarray(ref), rtol=5e-3, atol=5e-3)

    print("KERNEL_OK")
</pallas_src>

<mosaic_0001>
module attributes {stable_mosaic.version = 11 : i64} {
  func.func @_mtff_kernel(%arg0: i32, %arg1: i32, %arg2: memref<8x32xf32, #tpu.memory_space<vmem>>, %arg3: memref<32x1024xbf16, #tpu.memory_space<vmem>>, %arg4: memref<1x1024xf32, #tpu.memory_space<vmem>>, %arg5: memref<8x128xf32, #tpu.memory_space<vmem>>, %arg6: memref<8x1024xf32, #tpu.memory_space<vmem>>) attributes {dimension_semantics = [#tpu.dimension_semantics<parallel>, #tpu.dimension_semantics<arbitrary>], iteration_bounds = array<i64: 1, 1>, scalar_prefetch = 0 : i64, scratch_operands = 1 : i64, tpu.core_type = #tpu.core_type<tc>, window_params = [{transform_indices = @transform_0, window_bounds = array<i64: 8, 32>}, {transform_indices = @transform_1, window_bounds = array<i64: 32, 1024>}, {pipeline_mode = #tpu.pipeline_mode<synchronous>, transform_indices = @transform_2, window_bounds = array<i64: 1, 1024>}, {transform_indices = @transform_3, window_bounds = array<i64: 8, 128>}]} {
    %c0_i32 = arith.constant 0 : i32
    %0 = arith.cmpi eq, %arg1, %c0_i32 : i32
    %1 = arith.extui %0 : i1 to i32
    %c0_i32_0 = arith.constant 0 : i32
    %2 = arith.cmpi ne, %1, %c0_i32_0 : i32
    scf.if %2 {
      %c0_10 = arith.constant 0 : index
      %c0_11 = arith.constant 0 : index
      %13 = vector.load %arg4[%c0_10, %c0_11] : memref<1x1024xf32, #tpu.memory_space<vmem>>, vector<1x1024xf32>
      %14 = vector.shape_cast %13 : vector<1x1024xf32> to vector<1x1024xf32>
      %15 = vector.broadcast %14 : vector<1x1024xf32> to vector<8x1024xf32>
      %c0_12 = arith.constant 0 : index
      %c0_13 = arith.constant 0 : index
      %16 = vector.load %arg6[%c0_12, %c0_13] : memref<8x1024xf32, #tpu.memory_space<vmem>>, vector<8x1024xf32>
      tpu.vector_store %arg6[%c0_12, %c0_13], %15 {strides = array<i32>} : memref<8x1024xf32, #tpu.memory_space<vmem>>, vector<8x1024xf32>,
    } else {
    }
    %c0 = arith.constant 0 : index
    %c0_1 = arith.constant 0 : index
    %3 = vector.load %arg2[%c0, %c0_1] : memref<8x32xf32, #tpu.memory_space<vmem>>, vector<8x32xf32>
    %4 = arith.truncf %3 : vector<8x32xf32> to vector<8x32xbf16>
    %c0_2 = arith.constant 0 : index
    %c0_3 = arith.constant 0 : index
    %5 = vector.load %arg6[%c0_2, %c0_3] : memref<8x1024xf32, #tpu.memory_space<vmem>>, vector<8x1024xf32>
    %c0_4 = arith.constant 0 : index
    %c0_5 = arith.constant 0 : index
    %6 = vector.load %arg3[%c0_4, %c0_5] : memref<32x1024xbf16, #tpu.memory_space<vmem>>, vector<32x1024xbf16>
    %cst = arith.constant dense<0.000000e+00> : vector<8x1024xf32>
    %7 = tpu.matmul %4, %6, %cst {dimension_numbers = #tpu.dot_dimension_numbers<[1], [0], [0], [1], [0, 0, 1, 1], [], []>} : vector<8x32xbf16>, vector<32x1024xbf16>, vector<8x1024xf32> -> vector<8x1024xf32>
    %8 = arith.addf %5, %7 : vector<8x1024xf32>
    %c0_6 = arith.constant 0 : index
    %c0_7 = arith.constant 0 : index
    %9 = vector.load %arg6[%c0_6, %c0_7] : memref<8x1024xf32, #tpu.memory_space<vmem>>, vector<8x1024xf32>
    tpu.vector_store %arg6[%c0_6, %c0_7], %8 {strides = array<i32>} : memref<8x1024xf32, #tpu.memory_space<vmem>>, vector<8x1024xf32>,
    %c0_i32_8 = arith.constant 0 : i32
    %10 = arith.cmpi eq, %arg1, %c0_i32_8 : i32
    %11 = arith.extui %10 : i1 to i32
    %c0_i32_9 = arith.constant 0 : i32
    %12 = arith.cmpi ne, %11, %c0_i32_9 : i32
    scf.if %12 {
      %c0_10 = arith.constant 0 : index
      %c512 = arith.constant 512 : index
      %13 = vector.load %arg6[%c0_10, %c512] : memref<8x1024xf32, #tpu.memory_space<vmem>>, vector<8x128xf32>
      %c0_11 = arith.constant 0 : index
      %c640 = arith.constant 640 : index
      %14 = vector.load %arg6[%c0_11, %c640] : memref<8x1024xf32, #tpu.memory_space<vmem>>, vector<8x128xf32>
      %15 = arith.maximumf %13, %14 : vector<8x128xf32>
      %c0_12 = arith.constant 0 : index
      %c768 = arith.constant 768 : index
      %16 = vector.load %arg6[%c0_12, %c768] : memref<8x1024xf32, #tpu.memory_space<vmem>>, vector<8x128xf32>
      %17 = arith.maximumf %15, %16 : vector<8x128xf32>
      %c0_13 = arith.constant 0 : index
      %c896 = arith.constant 896 : index
      %18 = vector.load %arg6[%c0_13, %c896] : memref<8x1024xf32, #tpu.memory_space<vmem>>, vector<8x128xf32>
      %19 = arith.maximumf %17, %18 : vector<8x128xf32>
      %c0_14 = arith.constant 0 : index
      %c512_15 = arith.constant 512 : index
      %20 = vector.load %arg6[%c0_14, %c512_15] : memref<8x1024xf32, #tpu.memory_space<vmem>>, vector<8x128xf32>
      %21 = arith.subf %20, %19 : vector<8x128xf32>
      %22 = math.exp %21 : vector<8x128xf32>
      %c0_16 = arith.constant 0 : index
      %c0_17 = arith.constant 0 : index
      %23 = vector.load %arg6[%c0_16, %c0_17] : memref<8x1024xf32, #tpu.memory_space<vmem>>, vector<8x128xf32>
      %24 = arith.mulf %22, %23 : vector<8x128xf32>
      %c0_18 = arith.constant 0 : index
      %c640_19 = arith.constant 640 : index
      %25 = vector.load %arg6[%c0_18, %c640_19] : memref<8x1024xf32, #tpu.memory_space<vmem>>, vector<8x128xf32>
      %26 = arith.subf %25, %19 : vector<8x128xf32>
      %27 = math.exp %26 : vector<8x128xf32>
      %28 = arith.addf %22, %27 : vector<8x128xf32>
      %c0_20 = arith.constant 0 : index
      %c128 = arith.constant 128 : index
      %29 = vector.load %arg6[%c0_20, %c128] : memref<8x1024xf32, #tpu.memory_space<vmem>>, vector<8x128xf32>
      %30 = arith.mulf %27, %29 : vector<8x128xf32>
      %31 = arith.addf %24, %30 : vector<8x128xf32>
      %c0_21 = arith.constant 0 : index
      %c768_22 = arith.constant 768 : index
      %32 = vector.load %arg6[%c0_21, %c768_22] : memref<8x1024xf32, #tpu.memory_space<vmem>>, vector<8x128xf32>
      %33 = arith.subf %32, %19 : vector<8x128xf32>
      %34 = math.exp %33 : vector<8x128xf32>
      %35 = arith.addf %28, %34 : vector<8x128xf32>
      %c0_23 = arith.constant 0 : index
      %c256 = arith.constant 256 : index
      %36 = vector.load %arg6[%c0_23, %c256] : memref<8x1024xf32, #tpu.memory_space<vmem>>, vector<8x128xf32>
      %37 = arith.mulf %34, %36 : vector<8x128xf32>
      %38 = arith.addf %31, %37 : vector<8x128xf32>
      %c0_24 = arith.constant 0 : index
      %c896_25 = arith.constant 896 : index
      %39 = vector.load %arg6[%c0_24, %c896_25] : memref<8x1024xf32, #tpu.memory_space<vmem>>, vector<8x128xf32>
      %40 = arith.subf %39, %19 : vector<8x128xf32>
      %41 = math.exp %40 : vector<8x128xf32>
      %42 = arith.addf %35, %41 : vector<8x128xf32>
      %c0_26 = arith.constant 0 : index
      %c384 = arith.constant 384 : index
      %43 = vector.load %arg6[%c0_26, %c384] : memref<8x1024xf32, #tpu.memory_space<vmem>>, vector<8x128xf32>
      %44 = arith.mulf %41, %43 : vector<8x128xf32>
      %45 = arith.addf %38, %44 : vector<8x128xf32>
      %46 = tpu.reciprocal %42 {approx = true} : vector<8x128xf32> -> vector<8x128xf32>
      %47 = arith.mulf %45, %46 : vector<8x128xf32>
      %c0_27 = arith.constant 0 : index
      %c0_28 = arith.constant 0 : index
      %48 = vector.load %arg5[%c0_27, %c0_28] : memref<8x128xf32, #tpu.memory_space<vmem>>, vector<8x128xf32>
      tpu.vector_store %arg5[%c0_27, %c0_28], %47 {strides = array<i32>} : memref<8x128xf32, #tpu.memory_space<vmem>>, vector<8x128xf32>,
    } else {
    }
    return
  }
  func.func @transform_0(%arg0: i32, %arg1: i32) -> (i32, i32) {
    %c0_i32 = arith.constant 0 : i32
    return %arg0, %arg1 : i32, i32
  }
  func.func @transform_1(%arg0: i32, %arg1: i32) -> (i32, i32) {
    %c0_i32 = arith.constant 0 : i32
    %c0_i32_0 = arith.constant 0 : i32
    return %arg1, %c0_i32 : i32, i32
  }
  func.func @transform_2(%arg0: i32, %arg1: i32) -> (i32, i32) {
    %c0_i32 = arith.constant 0 : i32
    %c0_i32_0 = arith.constant 0 : i32
    %c0_i32_1 = arith.constant 0 : i32
    return %c0_i32, %c0_i32_0 : i32, i32
  }
  func.func @transform_3(%arg0: i32, %arg1: i32) -> (i32, i32) {
    %c0_i32 = arith.constant 0 : i32
    %c0_i32_0 = arith.constant 0 : i32
    return %arg0, %c0_i32 : i32, i32
  }
}

</mosaic_0001>

<llo_original>
// kernel: tpu_custom_call.1
$region0: #{tpu_custom_call.1}
  #allocation0 [shape = 'u32[]', space=smem, size = 0x4, offset = 0x4, fixed_abs, tag = 'smem constant byte address 0x4 - core index']
  #allocation1 [shape = 'u32[72,128]{1,0:T(1,128)}', space=vmem, size = 0x9000, scoped, tag = 'internal scratch']
  #allocation2 [shape = 'f32[8,1024]{1,0:T(8,128)}', space=vmem, size = 0x8000, scoped, tag = 'scratch operand']
  %s0 = inlined_call_operand.hbm [shape: f32[8,32], index: 0, kind: input, shape index: {}]
  %s1 = inlined_call_operand.hbm [shape: bf16[32,1024], index: 1, kind: input, shape index: {}]
  %s2 = inlined_call_operand.hbm [shape: f32[1,1024], index: 2, kind: input, shape index: {}]
  %s3 = inlined_call_operand.hbm [shape: f32[8,128], index: 3, kind: output, shape index: {}]
  %s4 = sld [smem:[#allocation0]]
  $region42: #{tpu_custom_call.1} parent=0
    _
  %s6 = ssub.s32 1, %s4
  %s7 = scalar_select 0, %s6, %s4
  $region1: #{tpu_custom_call.1} parent=0
    #allocation3 [shape = 'u8[4096]{0}', space=vmem, size = 0x1000, scoped, tag = 'input window, operand 0, single buffered']
    #allocation4 [shape = 's32[1]{0}', space=sflag, size = 0x4, scoped, tag = 'scoped memory for tpu_custom_call.1']
    #allocation5 [shape = 's32[1]{0}', space=sflag, size = 0x4, scoped, tag = 'scoped memory for tpu_custom_call.1']
    #allocation6 [shape = 'u8[65536]{0}', space=vmem, size = 0x10000, scoped, tag = 'input window, operand 1, single buffered']
    #allocation7 [shape = 's32[1]{0}', space=sflag, size = 0x4, scoped, tag = 'scoped memory for tpu_custom_call.1']
    #allocation8 [shape = 'u8[4096]{0}', space=vmem, size = 0x1000, scoped, tag = 'input window, operand 2, single buffered']
    #allocation9 [shape = 'u8[4096]{0}', space=vmem, size = 0x1000, scoped, tag = 'output window, operand 0, single buffered']
    %8 = vsyncpa [#allocation4], 0
    %9 = vsyncpa [#allocation7], 0
    %10 = vsyncpa [#allocation5], 0
    // Predicated region
    $region2: #{tpu_custom_call.1} parent=1 // pred_check
      _
    $region3: #{tpu_custom_call.1} parent=1 // pred_check_branch
      %12 = sbr.rel (0) target = $region5
    $region4: #{tpu_custom_call.1} parent=1 // pred_region
      %14 = vsyncadd [#allocation4], 0
      %s16 = sshll.u32 %s0, 4
      %s17 = int_to_ptr.hbm [resolvable:$true] %s16
      %s18 = sshll.u32 [#allocation3], 4
      %s19 = int_to_ptr.vmem [resolvable:$true] %s18
      %21 = dma.hbm_to_vmem [thread:$0]  %s17, 128, %s19, [#allocation4]
    $region5: #{tpu_custom_call.1} parent=1 // pred_fallthru
      _
    // Predicated region
    $region6: #{tpu_custom_call.1} parent=1 // pred_check
      _
    $region7: #{tpu_custom_call.1} parent=1 // pred_check_branch
      %23 = sbr.rel (0) target = $region9
    $region8: #{tpu_custom_call.1} parent=1 // pred_region
      %25 = vsyncadd [#allocation7], 0
      %s26 = sshll.u32 %s1, 4
      %s27 = int_to_ptr.hbm [resolvable:$true] %s26
      %s28 = sshll.u32 [#allocation6], 4
      %s29 = int_to_ptr.vmem [resolvable:$true] %s28
      %34 = dma.hbm_to_vmem [thread:$0]  %s27, 2048, %s29, [#allocation7], 512, 512, 32
    $region9: #{tpu_custom_call.1} parent=1 // pred_fallthru
      _
    // Predicated region
    $region10: #{tpu_custom_call.1} parent=1 // pred_check
      _
    $region11: #{tpu_custom_call.1} parent=1 // pred_check_branch
      %36 = sbr.rel (0) target = $region13
    $region12: #{tpu_custom_call.1} parent=1 // pred_region
      %38 = vsyncadd [#allocation7], 0
      %s40 = sshll.u32 %s2, 4
      %s41 = int_to_ptr.hbm [resolvable:$true] %s40
      %s42 = sshll.u32 [#allocation8], 4
      %s43 = int_to_ptr.vmem [resolvable:$true] %s42
      %45 = dma.hbm_to_vmem [thread:$0]  %s41, 128, %s43, [#allocation7]
    $region13: #{tpu_custom_call.1} parent=1 // pred_fallthru
      _
    // Predicated region
    $region14: #{tpu_custom_call.1} parent=1 // pred_check
      _
    $region15: #{tpu_custom_call.1} parent=1 // pred_check_branch
      %47 = sbr.rel (0) target = $region17
    $region16: #{tpu_custom_call.1} parent=1 // pred_region
      %49 = dma.done [#allocation4], 128
    $region17: #{tpu_custom_call.1} parent=1 // pred_fallthru
      _
    // Predicated region
    $region18: #{tpu_custom_call.1} parent=1 // pred_check
      _
    $region19: #{tpu_custom_call.1} parent=1 // pred_check_branch
      %51 = sbr.rel (0) target = $region21
    $region20: #{tpu_custom_call.1} parent=1 // pred_region
      %53 = dma.done [#allocation7], 2048
    $region21: #{tpu_custom_call.1} parent=1 // pred_fallthru
      _
    // Predicated region
    $region22: #{tpu_custom_call.1} parent=1 // pred_check
      _
    $region23: #{tpu_custom_call.1} parent=1 // pred_check_branch
      %55 = sbr.rel (0) target = $region25
    $region24: #{tpu_custom_call.1} parent=1 // pred_region
      %57 = dma.done [#allocation7], 128
    $region25: #{tpu_custom_call.1} parent=1 // pred_fallthru
      _
    %p59 = scmp.eq.s32.totalorder 0, 0
    // Predicated region
    $region26: #{tpu_custom_call.1} parent=1 // pred_check
      %p60 = pneg %p59
    $region27: #{tpu_custom_call.1} parent=1 // pred_check_branch
      %62 = sbr.rel (%p60) target = $region29
    $region28: #{tpu_custom_call.1} parent=1 // pred_region
      %v63 = vld [vmem:[#allocation8] sm:$0xff]
      %v65 = vperm.slane %v63, 0
      %v66 = vperm.slane %v63, 1
      %v67 = vperm.slane %v63, 2
      %v68 = vperm.slane %v63, 3
      %v69 = vperm.slane %v63, 4
      %v70 = vperm.slane %v63, 5
      %v71 = vperm.slane %v63, 6
      %v72 = vperm.slane %v63, 7
      %81 = vst [vmem:[#allocation2] sm:$0xff] %v65
      %82 = vst [vmem:[#allocation2 + $0x8] sm:$0xff] %v66
      %83 = vst [vmem:[#allocation2 + $0x10] sm:$0xff] %v67
      %84 = vst [vmem:[#allocation2 + $0x18] sm:$0xff] %v68
      %85 = vst [vmem:[#allocation2 + $0x20] sm:$0xff] %v69
      %86 = vst [vmem:[#allocation2 + $0x28] sm:$0xff] %v70
      %87 = vst [vmem:[#allocation2 + $0x30] sm:$0xff] %v71
      %88 = vst [vmem:[#allocation2 + $0x38] sm:$0xff] %v72
    $region29: #{tpu_custom_call.1} parent=1 // pred_fallthru
      _
    %v89 = vld [vmem:[#allocation3] sm:$0xff]
    %v90 = vpack.c.bf16 %v89, %v89
    %v91 = vld [vmem:[#allocation2] sm:$0xff]
    %v92 = vld [vmem:[#allocation2 + $0x8] sm:$0xff]
    %v93 = vld [vmem:[#allocation2 + $0x10] sm:$0xff]
    %v94 = vld [vmem:[#allocation2 + $0x18] sm:$0xff]
    %v95 = vld [vmem:[#allocation2 + $0x20] sm:$0xff]
    %v96 = vld [vmem:[#allocation2 + $0x28] sm:$0xff]
    %v97 = vld [vmem:[#allocation2 + $0x30] sm:$0xff]
    %v98 = vld [vmem:[#allocation2 + $0x38] sm:$0xff]
    %v99 = vld [vmem:[#allocation6] sm:$0xff]
    %v100 = vld [vmem:[#allocation6 + $0x8] sm:$0xff]
    %v101 = vld [vmem:[#allocation6 + $0x10] sm:$0xff]
    %v102 = vld [vmem:[#allocation6 + $0x18] sm:$0xff]
    %v103 = vld [vmem:[#allocation6 + $0x20] sm:$0xff]
    %v104 = vld [vmem:[#allocation6 + $0x28] sm:$0xff]
    %v105 = vld [vmem:[#allocation6 + $0x30] sm:$0xff]
    %v106 = vld [vmem:[#allocation6 + $0x38] sm:$0xff]
    %v107 = vld [vmem:[#allocation6 + $0x40] sm:$0xff]
    %v108 = vld [vmem:[#allocation6 + $0x48] sm:$0xff]
    %v109 = vld [vmem:[#allocation6 + $0x50] sm:$0xff]
    %v110 = vld [vmem:[#allocation6 + $0x58] sm:$0xff]
    %v111 = vld [vmem:[#allocation6 + $0x60] sm:$0xff]
    %v112 = vld [vmem:[#allocation6 + $0x68] sm:$0xff]
    %v113 = vld [vmem:[#allocation6 + $0x70] sm:$0xff]
    %v114 = vld [vmem:[#allocation6 + $0x78] sm:$0xff]
    %v131 = vunpack.c.l.b16 %v99
    %v132 = vunpack.c.h.b16 %v99
    %v133 = vunpack.c.l.b16 %v100
    %v134 = vunpack.c.h.b16 %v100
    %v135 = vunpack.c.l.b16 %v101
    %v136 = vunpack.c.h.b16 %v101
    %v137 = vunpack.c.l.b16 %v102
    %v138 = vunpack.c.h.b16 %v102
    %v139 = vunpack.c.l.b16 %v103
    %v140 = vunpack.c.h.b16 %v103
    %v141 = vunpack.c.l.b16 %v104
    %v142 = vunpack.c.h.b16 %v104
    %v143 = vunpack.c.l.b16 %v105
    %v144 = vunpack.c.h.b16 %v105
    %v145 = vunpack.c.l.b16 %v106
    %v146 = vunpack.c.h.b16 %v106
    %v147 = vunpack.c.l.b16 %v107
    %v148 = vunpack.c.h.b16 %v107
    %v149 = vunpack.c.l.b16 %v108
    %v150 = vunpack.c.h.b16 %v108
    %v151 = vunpack.c.l.b16 %v109
    %v152 = vunpack.c.h.b16 %v109
    %v153 = vunpack.c.l.b16 %v110
    %v154 = vunpack.c.h.b16 %v110
    %v155 = vunpack.c.l.b16 %v111
    %v156 = vunpack.c.h.b16 %v111
    %v157 = vunpack.c.l.b16 %v112
    %v158 = vunpack.c.h.b16 %v112
    %v159 = vunpack.c.l.b16 %v113
    %v160 = vunpack.c.h.b16 %v113
    %v161 = vunpack.c.l.b16 %v114
    %v162 = vunpack.c.h.b16 %v114
    %v163 = vpack.c.b16 %v139, %v131
    %v164 = vpack.c.b16 %v140, %v132
    %v165 = vpack.c.b16 %v141, %v133
    %v166 = vpack.c.b16 %v142, %v134
    %v167 = vpack.c.b16 %v143, %v135
    %v168 = vpack.c.b16 %v144, %v136
    %v169 = vpack.c.b16 %v145, %v137
    %v170 = vpack.c.b16 %v146, %v138
    %v171 = vpack.c.b16 %v155, %v147
    %v172 = vpack.c.b16 %v156, %v148
    %v173 = vpack.c.b16 %v157, %v149
    %v174 = vpack.c.b16 %v158, %v150
    %v175 = vpack.c.b16 %v159, %v151
    %v176 = vpack.c.b16 %v160, %v152
    %v177 = vpack.c.b16 %v161, %v153
    %v178 = vpack.c.b16 %v162, %v154
    %vm195 = vcmask 261120
    %v197 = vsel %vm195, %v90, 0
    %199 = vmatpush.bf16.msra.mxu0 0
    %200 = vmatpush.bf16.msra.mxu0 0
    %201 = vmatpush.bf16.msra.mxu0 0
    %202 = vmatpush.bf16.msra.mxu0 0
    %203 = vmatpush.bf16.msra.mxu0 0
    %204 = vmatpush.bf16.msra.mxu0 0
    %205 = vmatpush.bf16.msra.mxu0 %v171
    %206 = vmatpush.bf16.msra.mxu0 %v163
    %207 = vmatmul.bf16.gmra.mxu0 %v197
    %v208 = vpop.f32.mrf.mxu0
    %v209 = vadd.f32 0.0, %v208
    %v210 = vpop.f32.mrf.mxu0
    %211 = vdwg.mxu0
    %212 = vmatpush.bf16.msra.mxu0 0
    %213 = vmatpush.bf16.msra.mxu0 0
    %214 = vmatpush.bf16.msra.mxu0 0
    %215 = vmatpush.bf16.msra.mxu0 0
    %216 = vmatpush.bf16.msra.mxu0 0
    %217 = vmatpush.bf16.msra.mxu0 0
    %218 = vmatpush.bf16.msra.mxu0 %v172
    %219 = vmatpush.bf16.msra.mxu0 %v164
    %220 = vmatmul.bf16.gmra.mxu0 %v197
    %v221 = vpop.f32.mrf.mxu0
    %v222 = vadd.f32 0.0, %v221
    %v223 = vpop.f32.mrf.mxu0
    %224 = vdwg.mxu0
    %225 = vmatpush.bf16.msra.mxu0 0
    %226 = vmatpush.bf16.msra.mxu0 0
    %227 = vmatpush.bf16.msra.mxu0 0
    %228 = vmatpush.bf16.msra.mxu0 0
    %229 = vmatpush.bf16.msra.mxu0 0
    %230 = vmatpush.bf16.msra.mxu0 0
    %231 = vmatpush.bf16.msra.mxu0 %v173
    %232 = vmatpush.bf16.msra.mxu0 %v165
    %233 = vmatmul.bf16.gmra.mxu0 %v197
    %v234 = vpop.f32.mrf.mxu0
    %v235 = vadd.f32 0.0, %v234
    %v236 = vpop.f32.mrf.mxu0
    %237 = vdwg.mxu0
    %238 = vmatpush.bf16.msra.mxu0 0
    %239 = vmatpush.bf16.msra.mxu0 0
    %240 = vmatpush.bf16.msra.mxu0 0
    %241 = vmatpush.bf16.msra.mxu0 0
    %242 = vmatpush.bf16.msra.mxu0 0
    %243 = vmatpush.bf16.msra.mxu0 0
    %244 = vmatpush.bf16.msra.mxu0 %v174
    %245 = vmatpush.bf16.msra.mxu0 %v166
    %246 = vmatmul.bf16.gmra.mxu0 %v197
    %v247 = vpop.f32.mrf.mxu0
    %v248 = vadd.f32 0.0, %v247
    %v249 = vpop.f32.mrf.mxu0
    %250 = vdwg.mxu0
    %251 = vmatpush.bf16.msra.mxu0 0
    %252 = vmatpush.bf16.msra.mxu0 0
    %253 = vmatpush.bf16.msra.mxu0 0
    %254 = vmatpush.bf16.msra.mxu0 0
    %255 = vmatpush.bf16.msra.mxu0 0
    %256 = vmatpush.bf16.msra.mxu0 0
    %257 = vmatpush.bf16.msra.mxu0 %v175
    %258 = vmatpush.bf16.msra.mxu0 %v167
    %259 = vmatmul.bf16.gmra.mxu0 %v197
    %v260 = vpop.f32.mrf.mxu0
    %v261 = vadd.f32 0.0, %v260
    %v262 = vpop.f32.mrf.mxu0
    %263 = vdwg.mxu0
    %264 = vmatpush.bf16.msra.mxu0 0
    %265 = vmatpush.bf16.msra.mxu0 0
    %266 = vmatpush.bf16.msra.mxu0 0
    %267 = vmatpush.bf16.msra.mxu0 0
    %268 = vmatpush.bf16.msra.mxu0 0
    %269 = vmatpush.bf16.msra.mxu0 0
    %270 = vmatpush.bf16.msra.mxu0 %v176
    %271 = vmatpush.bf16.msra.mxu0 %v168
    %272 = vmatmul.bf16.gmra.mxu0 %v197
    %v273 = vpop.f32.mrf.mxu0
    %v274 = vadd.f32 0.0, %v273
    %v275 = vpop.f32.mrf.mxu0
    %276 = vdwg.mxu0
    %277 = vmatpush.bf16.msra.mxu0 0
    %278 = vmatpush.bf16.msra.mxu0 0
    %279 = vmatpush.bf16.msra.mxu0 0
    %280 = vmatpush.bf16.msra.mxu0 0
    %281 = vmatpush.bf16.msra.mxu0 0
    %282 = vmatpush.bf16.msra.mxu0 0
    %283 = vmatpush.bf16.msra.mxu0 %v177
    %284 = vmatpush.bf16.msra.mxu0 %v169
    %285 = vmatmul.bf16.gmra.mxu0 %v197
    %v286 = vpop.f32.mrf.mxu0
    %v287 = vadd.f32 0.0, %v286
    %v288 = vpop.f32.mrf.mxu0
    %289 = vdwg.mxu0
    %290 = vmatpush.bf16.msra.mxu0 0
    %291 = vmatpush.bf16.msra.mxu0 0
    %292 = vmatpush.bf16.msra.mxu0 0
    %293 = vmatpush.bf16.msra.mxu0 0
    %294 = vmatpush.bf16.msra.mxu0 0
    %295 = vmatpush.bf16.msra.mxu0 0
    %296 = vmatpush.bf16.msra.mxu0 %v178
    %297 = vmatpush.bf16.msra.mxu0 %v170
    %298 = vmatmul.bf16.gmra.mxu0 %v197
    %v299 = vpop.f32.mrf.mxu0
    %v300 = vadd.f32 0.0, %v299
    %v301 = vpop.f32.mrf.mxu0
    %302 = vdwg.mxu0
    %v303 = vadd.f32 %v91, %v209
    %v304 = vadd.f32 %v92, %v222
    %v305 = vadd.f32 %v93, %v235
    %v306 = vadd.f32 %v94, %v248
    %v307 = vadd.f32 %v95, %v261
    %v308 = vadd.f32 %v96, %v274
    %v309 = vadd.f32 %v97, %v287
    %v310 = vadd.f32 %v98, %v300
    %311 = vst [vmem:[#allocation2] sm:$0xff] %v303
    %312 = vst [vmem:[#allocation2 + $0x8] sm:$0xff] %v304
    %313 = vst [vmem:[#allocation2 + $0x10] sm:$0xff] %v305
    %314 = vst [vmem:[#allocation2 + $0x18] sm:$0xff] %v306
    %315 = vst [vmem:[#allocation2 + $0x20] sm:$0xff] %v307
    %316 = vst [vmem:[#allocation2 + $0x28] sm:$0xff] %v308
    %317 = vst [vmem:[#allocation2 + $0x30] sm:$0xff] %v309
    %318 = vst [vmem:[#allocation2 + $0x38] sm:$0xff] %v310
    // Predicated region
    $region30: #{tpu_custom_call.1} parent=1 // pred_check
      %p319 = pneg %p59
    $region31: #{tpu_custom_call.1} parent=1 // pred_check_branch
      %321 = sbr.rel (%p319) target = $region33
    $region32: #{tpu_custom_call.1} parent=1 // pred_region
      %v322 = vld [vmem:[#allocation2 + $0x20] sm:$0xff]
      %v323 = vld [vmem:[#allocation2 + $0x28] sm:$0xff]
      %v324 = vmax.f32 %v322, %v323
      %v325 = vld [vmem:[#allocation2 + $0x30] sm:$0xff]
      %v326 = vmax.f32 %v324, %v325
      %v327 = vld [vmem:[#allocation2 + $0x38] sm:$0xff]
      %v328 = vmax.f32 %v326, %v327
      %v329 = vsub.f32 %v322, %v328
      %v330 = vmul.f32 %v329, 1.442695
      %v331 = vpow.pop %v330
      %v332 = vld [vmem:[#allocation2] sm:$0xff]
      %v333 = vmul.f32 %v331, %v332
      %v334 = vsub.f32 %v323, %v328
      %v335 = vmul.f32 %v334, 1.442695
      %v336 = vpow.pop %v335
      %v337 = vadd.f32 %v331, %v336
      %v338 = vld [vmem:[#allocation2 + $0x8] sm:$0xff]
      %v339 = vmul.f32 %v336, %v338
      %v340 = vadd.f32 %v333, %v339
      %v341 = vsub.f32 %v325, %v328
      %v342 = vmul.f32 %v341, 1.442695
      %v343 = vpow.pop %v342
      %v344 = vadd.f32 %v337, %v343
      %v345 = vld [vmem:[#allocation2 + $0x10] sm:$0xff]
      %v346 = vmul.f32 %v343, %v345
      %v347 = vadd.f32 %v340, %v346
      %v348 = vsub.f32 %v327, %v328
      %v349 = vmul.f32 %v348, 1.442695
      %v350 = vpow.pop %v349
      %v351 = vadd.f32 %v344, %v350
      %v352 = vld [vmem:[#allocation2 + $0x18] sm:$0xff]
      %v353 = vmul.f32 %v350, %v352
      %v354 = vadd.f32 %v347, %v353
      %v355 = vrcp.pop %v351
      %v356 = vmul.f32 %v354, %v355
      %357 = vst [vmem:[#allocation9] sm:$0xff] %v356
    $region33: #{tpu_custom_call.1} parent=1 // pred_fallthru
      _
    // Predicated region
    $region34: #{tpu_custom_call.1} parent=1 // pred_check
      _
    $region35: #{tpu_custom_call.1} parent=1 // pred_check_branch
      %359 = sbr.rel (0) target = $region37
    $region36: #{tpu_custom_call.1} parent=1 // pred_region
      %361 = vsyncadd [#allocation5], 0
      %s363 = sshll.u32 [#allocation9], 4
      %s364 = int_to_ptr.vmem [resolvable:$true] %s363
      %s365 = sshll.u32 %s3, 4
      %s366 = int_to_ptr.hbm [resolvable:$true] %s365
      %368 = dma.vmem_to_hbm [thread:$0]  %s364, 128, %s366, [#allocation5]
    $region37: #{tpu_custom_call.1} parent=1 // pred_fallthru
      _
    // Predicated region
    $region38: #{tpu_custom_call.1} parent=1 // pred_check
      _
    $region39: #{tpu_custom_call.1} parent=1 // pred_check_branch
      %370 = sbr.rel (0) target = $region41
    $region40: #{tpu_custom_call.1} parent=1 // pred_region
      %372 = dma.done [#allocation5], 128
    $region41: #{tpu_custom_call.1} parent=1 // pred_fallthru
      _
    %373 = vsyncpa [#allocation4], 1
    %374 = vsyncpa [#allocation7], 1
    %375 = vsyncpa [#allocation5], 1

</llo_original>
